<compile_context>
chip_gen: v5e
topology: v5e:2x2
jax: 0.10.0
libtpu: 0.0.40
codegen_flags: <defaults>
</compile_context>

<pallas_src>
import functools

import jax
import jax.numpy as jnp
import numpy as np
from jax.experimental import pallas as pl
from jax.experimental.pallas import tpu as pltpu


def _shortest_path_loss_kernel(labels_ref, logits_ref, pathm_ref, out_ref, *,
                               num_rows):
    logits = logits_ref[...]          # (TB, C)  native dtype (bf16/f32)
    labels = labels_ref[...]          # (TB, 1)  int32
    m = pathm_ref[...]                # (C, C)   bf16 (or f32)
    tb, c = logits.shape

    col = jax.lax.broadcasted_iota(jnp.int32, (tb, c), 1)

    # torch.argmax: first index of the row max, computed in the logits' native
    # dtype (no upcast).
    row_max = jnp.max(logits, axis=1, keepdims=True)
    pred_idx = jnp.min(jnp.where(logits == row_max, col, c), axis=1,
                       keepdims=True)                       # (TB, 1) int32

    # Row gather M[true, :] via one-hot(true) @ M on the MXU (bf16 in, f32 acc).
    onehot_true = (col == labels).astype(m.dtype)           # (TB, C)
    rows = jnp.dot(onehot_true, m,
                   preferred_element_type=jnp.float32)      # (TB, C) f32

    # Fused column select (no one-hot(pred) temporary) -> per-row distance.
    dist = jnp.sum(jnp.where(col == pred_idx, rows, 0.0),
                   axis=1, keepdims=True)                   # (TB, 1) f32

    # Mask overhang rows of the last partial tile, reduce to a per-tile sum.
    row = jax.lax.broadcasted_iota(jnp.int32, (tb, 1), 0)
    valid = (pl.program_id(0) * tb + row) < num_rows
    tile_sum = jnp.sum(jnp.where(valid, dist, 0.0),
                       axis=0, keepdims=True)               # (1, 1)
    out_ref[...] = tile_sum.reshape(1, 1, 1)


def path_dict_to_matrix(path_lengths_dict, num_classes, dtype=jnp.bfloat16):
    """Dense symmetric path-length matrix from the module's dict.

    bf16 is exact for small integer hop counts (<= 256); pass dtype=f32 for
    arbitrary-valued distances.  The PyTorch `.get((a,b)) or .get((b,a))`
    falsy fallback on stored 0.0 distances also resolves to 0.0 here.
    """
    m = np.zeros((num_classes, num_classes), dtype=np.float32)
    for (a, b), d in path_lengths_dict.items():
        m[a, b] = float(d)
        m[b, a] = float(d)
    return jnp.asarray(m, dtype=dtype)


def shortest_path_loss(predicted_logits, true_labels, path_matrix):
    """Pallas equivalent of ShortestPathLoss.forward (returns a scalar f32)."""
    logits = predicted_logits                      # native dtype, no upcast
    labels = true_labels.astype(jnp.int32).reshape(-1, 1)
    b, c = logits.shape
    elem = logits.dtype.itemsize
    pm_elem = path_matrix.dtype.itemsize

    # Tile the batch so each grid step moves ~2 MiB of logits (multiple of 8
    # rows); keep >= 2 tiles when B is large so "parallel" can use both v7x TCs.
    if b <= 8:
        tb = b
    else:
        max_tb = max(8, (2 * 1024 * 1024) // max(1, c * elem))
        tb = max(8, (min(b, max_tb) // 8) * 8)
        if (b + tb - 1) // tb < 2 and b > 16:
            tb = max(8, (((b + 1) // 2 + 7) // 8) * 8)
    num_tiles = (b + tb - 1) // tb

    # Double-buffered logits/labels tiles + path matrix; headroom for output.
    footprint = 2 * tb * c * elem + 2 * tb * 4 + 2 * c * c * pm_elem
    vmem_limit = int(min(64 << 20, max(footprint + (2 << 20), 16 << 20)))

    cost = pl.CostEstimate(
        flops=2 * b * c * c + 8 * b * c,
        transcendentals=0,
        bytes_accessed=b * c * elem + b * 4 + c * c * pm_elem + num_tiles * 4,
    )

    per_tile = pl.pallas_call(
        functools.partial(_shortest_path_loss_kernel, num_rows=b),
        out_shape=jax.ShapeDtypeStruct((num_tiles, 1, 1), jnp.float32),
        grid=(num_tiles,),
        in_specs=[
            pl.BlockSpec((tb, 1), lambda i: (i, 0)),      # labels
            pl.BlockSpec((tb, c), lambda i: (i, 0)),      # logits (full C extent)
            pl.BlockSpec((c, c), lambda i: (0, 0)),       # path matrix (DMA'd once)
        ],
        out_specs=pl.BlockSpec((1, 1, 1), lambda i: (i, 0, 0)),
        compiler_params=pltpu.CompilerParams(
            dimension_semantics=("parallel",),
            vmem_limit_bytes=vmem_limit,
        ),
        cost_estimate=cost,
    )(labels, logits, path_matrix)

    return jnp.sum(per_tile) / float(b)


def _ref_shortest_path_loss(logits, labels, path_lengths_dict):
    """Direct numpy port of the PyTorch reference (for validation)."""
    logits = np.asarray(jnp.asarray(logits, dtype=jnp.float32))
    labels = np.asarray(labels)
    top1 = np.argmax(logits, axis=1)
    total = 0.0
    for t, p in zip(labels, top1):
        d = (path_lengths_dict.get((int(t), int(p)))
             or path_lengths_dict.get((int(p), int(t)))
             or 0.0)
        total += float(d)
    return total / logits.shape[0]


if __name__ == "__main__":
    B, C = 8, 16
    key = jax.random.PRNGKey(0)
    k1, k2 = jax.random.split(key)

    # Logits in bf16 (native model dtype) — streamed without any wrapper cast.
    predicted_logits = jax.random.normal(k1, (B, C), dtype=jnp.float32).astype(
        jnp.bfloat16)
    true_labels = jax.random.randint(k2, (B,), 0, C, dtype=jnp.int32)

    # Synthetic hierarchy distances: d(i, j) = |i - j| hops, 0 on the diagonal.
    # TODO(synk): the Python-dict lookup itself has no in-kernel equivalent; it
    # is materialized once as a dense symmetric matrix on the host.
    path_lengths_dict = {
        (i, j): float(abs(i - j)) for i in range(C) for j in range(i, C)
    }
    path_matrix = path_dict_to_matrix(path_lengths_dict, C, dtype=jnp.bfloat16)

    loss = shortest_path_loss(predicted_logits, true_labels, path_matrix)
    loss = jax.block_until_ready(loss)

    ref = _ref_shortest_path_loss(predicted_logits, true_labels,
                                  path_lengths_dict)
    assert np.isclose(float(loss), float(ref), atol=1e-5), (float(loss), float(ref))

    print("KERNEL_OK")
</pallas_src>

<mosaic_0001>
module attributes {stable_mosaic.version = 11 : i64} {
  func.func @_shortest_path_loss_kernel(%arg0: i32, %arg1: memref<8x1xi32, #tpu.memory_space<vmem>>, %arg2: memref<8x16xbf16, #tpu.memory_space<vmem>>, %arg3: memref<16x16xbf16, #tpu.memory_space<vmem>>, %arg4: memref<1x1x1xf32, #tpu.memory_space<vmem>>) attributes {dimension_semantics = [#tpu.dimension_semantics<parallel>], iteration_bounds = array<i64: 1>, scalar_prefetch = 0 : i64, scratch_operands = 0 : i64, tpu.core_type = #tpu.core_type<tc>, window_params = [{transform_indices = @transform_0, window_bounds = array<i64: 8, 1>}, {transform_indices = @transform_1, window_bounds = array<i64: 8, 16>}, {pipeline_mode = #tpu.pipeline_mode<synchronous>, transform_indices = @transform_2, window_bounds = array<i64: 16, 16>}, {transform_indices = @transform_3, window_bounds = array<i64: 1, 1, 1>}]} {
    %c0 = arith.constant 0 : index
    %c0_0 = arith.constant 0 : index
    %0 = vector.load %arg2[%c0, %c0_0] : memref<8x16xbf16, #tpu.memory_space<vmem>>, vector<8x16xbf16>
    %c0_1 = arith.constant 0 : index
    %c0_2 = arith.constant 0 : index
    %1 = vector.load %arg1[%c0_1, %c0_2] : memref<8x1xi32, #tpu.memory_space<vmem>>, vector<8x1xi32>
    %c0_3 = arith.constant 0 : index
    %c0_4 = arith.constant 0 : index
    %2 = vector.load %arg3[%c0_3, %c0_4] : memref<16x16xbf16, #tpu.memory_space<vmem>>, vector<16x16xbf16>
    %3 = tpu.iota {dimensions = array<i32: 1>} : vector<8x16xi32>
    %cst = arith.constant dense<0xFF80> : vector<8xbf16>
    %4 = vector.multi_reduction <maximumf>, %0, %cst [1] : vector<8x16xbf16> to vector<8xbf16>
    %5 = vector.shape_cast %4 : vector<8xbf16> to vector<8x1xbf16>
    %6 = vector.broadcast %5 : vector<8x1xbf16> to vector<8x16xbf16>
    %7 = arith.cmpf oeq, %0, %6 : vector<8x16xbf16>
    %c16_i32 = arith.constant 16 : i32
    %8 = vector.broadcast %c16_i32 : i32 to vector<8x16xi32>
    %9 = arith.select %7, %3, %8 : vector<8x16xi1>, vector<8x16xi32>
    %cst_5 = arith.constant dense<2147483647> : vector<8xi32>
    %10 = vector.multi_reduction <minsi>, %9, %cst_5 [1] : vector<8x16xi32> to vector<8xi32>
    %11 = vector.shape_cast %10 : vector<8xi32> to vector<8x1xi32>
    %12 = vector.broadcast %1 : vector<8x1xi32> to vector<8x16xi32>
    %13 = arith.cmpi eq, %3, %12 : vector<8x16xi32>
    %14 = arith.extui %13 : vector<8x16xi1> to vector<8x16xi32>
    %15 = arith.sitofp %14 : vector<8x16xi32> to vector<8x16xf32>
    %16 = arith.truncf %15 : vector<8x16xf32> to vector<8x16xbf16>
    %cst_6 = arith.constant dense<0.000000e+00> : vector<8x16xf32>
    %17 = tpu.matmul %16, %2, %cst_6 {dimension_numbers = #tpu.dot_dimension_numbers<[1], [0], [0], [1], [0, 0, 1, 1], [], []>} : vector<8x16xbf16>, vector<16x16xbf16>, vector<8x16xf32> -> vector<8x16xf32>
    %18 = vector.broadcast %11 : vector<8x1xi32> to vector<8x16xi32>
    %19 = arith.cmpi eq, %3, %18 : vector<8x16xi32>
    %cst_7 = arith.constant 0.000000e+00 : f32
    %20 = vector.broadcast %cst_7 : f32 to vector<8x16xf32>
    %21 = arith.select %19, %17, %20 : vector<8x16xi1>, vector<8x16xf32>
    %cst_8 = arith.constant dense<0.000000e+00> : vector<8xf32>
    %22 = vector.multi_reduction <add>, %21, %cst_8 [1] : vector<8x16xf32> to vector<8xf32>
    %23 = vector.shape_cast %22 : vector<8xf32> to vector<8x1xf32>
    %24 = tpu.iota {dimensions = array<i32: 0>} : vector<8x1xi32>
    %c8_i32 = arith.constant 8 : i32
    %25 = arith.muli %arg0, %c8_i32 : i32
    %26 = vector.broadcast %25 : i32 to vector<8x1xi32>
    %27 = arith.addi %26, %24 : vector<8x1xi32>
    %c8_i32_9 = arith.constant 8 : i32
    %28 = vector.broadcast %c8_i32_9 : i32 to vector<8x1xi32>
    %29 = arith.cmpi slt, %27, %28 : vector<8x1xi32>
    %cst_10 = arith.constant 0.000000e+00 : f32
    %30 = vector.broadcast %cst_10 : f32 to vector<8x1xf32>
    %31 = arith.select %29, %23, %30 : vector<8x1xi1>, vector<8x1xf32>
    %cst_11 = arith.constant dense<0.000000e+00> : vector<1xf32>
    %32 = vector.multi_reduction <add>, %31, %cst_11 [0] : vector<8x1xf32> to vector<1xf32>
    %33 = vector.shape_cast %32 : vector<1xf32> to vector<1x1xf32>
    %34 = vector.shape_cast %33 : vector<1x1xf32> to vector<1x1x1xf32>
    %c0_12 = arith.constant 0 : index
    %c0_13 = arith.constant 0 : index
    %c0_14 = arith.constant 0 : index
    %35 = vector.load %arg4[%c0_12, %c0_13, %c0_14] : memref<1x1x1xf32, #tpu.memory_space<vmem>>, vector<1x1x1xf32>
    tpu.vector_store %arg4[%c0_12, %c0_13, %c0_14], %34 {strides = array<i32>} : memref<1x1x1xf32, #tpu.memory_space<vmem>>, vector<1x1x1xf32>,
    return
  }
  func.func @transform_0(%arg0: i32) -> (i32, i32) {
    %c0_i32 = arith.constant 0 : i32
    %c0_i32_0 = arith.constant 0 : i32
    return %arg0, %c0_i32 : i32, i32
  }
  func.func @transform_1(%arg0: i32) -> (i32, i32) {
    %c0_i32 = arith.constant 0 : i32
    %c0_i32_0 = arith.constant 0 : i32
    return %arg0, %c0_i32 : i32, i32
  }
  func.func @transform_2(%arg0: i32) -> (i32, i32) {
    %c0_i32 = arith.constant 0 : i32
    %c0_i32_0 = arith.constant 0 : i32
    %c0_i32_1 = arith.constant 0 : i32
    return %c0_i32, %c0_i32_0 : i32, i32
  }
  func.func @transform_3(%arg0: i32) -> (i32, i32, i32) {
    %c0_i32 = arith.constant 0 : i32
    %c0_i32_0 = arith.constant 0 : i32
    %c0_i32_1 = arith.constant 0 : i32
    return %arg0, %c0_i32, %c0_i32_0 : i32, i32, i32
  }
}

</mosaic_0001>

<llo_original>
// kernel: tpu_custom_call.1
$region0: #{tpu_custom_call.1}
  #allocation0 [shape = 'u32[]', space=smem, size = 0x4, offset = 0x4, fixed_abs, tag = 'smem constant byte address 0x4 - core index']
  #allocation1 [shape = 'u32[72,128]{1,0:T(1,128)}', space=vmem, size = 0x9000, scoped, tag = 'internal scratch']
  %s0 = inlined_call_operand.vmem [shape: s32[8,1], index: 0, kind: input, shape index: {}]
  %s1 = inlined_call_operand.hbm [shape: bf16[8,16], index: 1, kind: input, shape index: {}]
  %s2 = inlined_call_operand.vmem [shape: bf16[16,16], index: 2, kind: input, shape index: {}]
  %s3 = inlined_call_operand.hbm [shape: f32[1,1,1], index: 3, kind: output, shape index: {}]
  %s4 = sld [smem:[#allocation0]]
  $region26: #{tpu_custom_call.1} parent=0
    _
  %s6 = ssub.s32 1, %s4
  %s7 = scalar_select 0, %s6, %s4
  $region1: #{tpu_custom_call.1} parent=0
    #allocation2 [shape = 'u8[2048]{0}', space=vmem, size = 0x800, scoped, tag = 'input window, operand 1, single buffered']
    #allocation3 [shape = 's32[1]{0}', space=sflag, size = 0x4, scoped, tag = 'scoped memory for tpu_custom_call.1']
    #allocation4 [shape = 's32[1]{0}', space=sflag, size = 0x4, scoped, tag = 'scoped memory for tpu_custom_call.1']
    #allocation5 [shape = 'u8[512]{0}', space=vmem, size = 0x400, scoped, tag = 'output window, operand 0, single buffered']
    %8 = vsyncpa [#allocation3], 0
    %9 = vsyncpa [#allocation4], 0
    // Predicated region
    $region2: #{tpu_custom_call.1} parent=1 // pred_check
      _
    $region3: #{tpu_custom_call.1} parent=1 // pred_check_branch
      %11 = sbr.rel (0) target = $region5
    $region4: #{tpu_custom_call.1} parent=1 // pred_region
      _
    $region5: #{tpu_custom_call.1} parent=1 // pred_fallthru
      _
    // Predicated region
    $region6: #{tpu_custom_call.1} parent=1 // pred_check
      _
    $region7: #{tpu_custom_call.1} parent=1 // pred_check_branch
      %13 = sbr.rel (0) target = $region9
    $region8: #{tpu_custom_call.1} parent=1 // pred_region
      %15 = vsyncadd [#allocation3], 0
      %s17 = sshll.u32 %s1, 4
      %s18 = int_to_ptr.hbm [resolvable:$true] %s17
      %s19 = sshll.u32 [#allocation2], 4
      %s20 = int_to_ptr.vmem [resolvable:$true] %s19
      %22 = dma.hbm_to_vmem [thread:$0]  %s18, 64, %s20, [#allocation3]
    $region9: #{tpu_custom_call.1} parent=1 // pred_fallthru
      _
    // Predicated region
    $region10: #{tpu_custom_call.1} parent=1 // pred_check
      _
    $region11: #{tpu_custom_call.1} parent=1 // pred_check_branch
      %24 = sbr.rel (0) target = $region13
    $region12: #{tpu_custom_call.1} parent=1 // pred_region
      _
    $region13: #{tpu_custom_call.1} parent=1 // pred_fallthru
      _
    // Predicated region
    $region14: #{tpu_custom_call.1} parent=1 // pred_check
      _
    $region15: #{tpu_custom_call.1} parent=1 // pred_check_branch
      %26 = sbr.rel (0) target = $region17
    $region16: #{tpu_custom_call.1} parent=1 // pred_region
      %28 = dma.done [#allocation3], 64
    $region17: #{tpu_custom_call.1} parent=1 // pred_fallthru
      _
    %v30 = vld [vmem:[#allocation2] sm:$0xf]
    %v31 = vld [vmem:[%s0] sm:$0xff]
    %v32 = vld [vmem:[%s2] sm:$0xf]
    %v33 = vld [vmem:[%s2 + $0x4] sm:$0xf]
    %v34 = vlaneseq
    %v35 = vand.u32 %v34, 127
    %v36 = vunpack.c.l.bf16 %v30
    %vm37 = vcmask 130048
    %v38 = vsel %vm37, %v36, -inf
    %39 = vmax.xlane.f32.xlu0 %v38
    %v40 = vpop.xlane.xlu0 %39
    %v41 = vpack.c.bf16 %v40, %v40
    %v42 = vunpack.c.l.bf16 %v41
    %vm43 = vcmp.eq.f32.partialorder %v36, %v42
    %v44 = vsel %vm43, %v35, 16
    %v45 = vsel %vm37, %v44, 2147483647
    %v46 = vand.u32 %v45, 65535
    %v47 = vshra.s32 %v45, 16
    %v48 = vcvt.s32.f32 %v46
    %v49 = vcvt.s32.f32 %v47
    %50 = vmin.xlane.f32.xlu0 %v49
    %v51 = vpop.xlane.xlu0 %50
    %vm52 = vcmp.eq.f32.partialorder %v49, %v51
    %v53 = vsel %vm52, %v48, inf
    %54 = vmin.xlane.f32.xlu0 %v53
    %v55 = vpop.xlane.xlu0 %54
    %v56 = vcvt.f32.s32 %v55
    %v57 = vcvt.f32.s32 %v51
    %v58 = vshll.u32 %v57, 16
    %v59 = vadd.s32 %v58, %v56
    %60 = vset.pattern.permute.xlu0 0
    %61 = vperm.xlu0 %60, %v31
    %v62 = vpop.permute.xlu0 %61
    %vm63 = vcmp.eq.s32.totalorder %v35, %v62
    %v64 = vsel %vm63, 1, 0
    %v65 = vcvt.s32.f32 %v64
    %v66 = vpack.c.bf16 %v65, %v65
    %v69 = vunpack.c.l.b16 %v32
    %v70 = vunpack.c.l.b16 %v33
    %v71 = vpack.c.b16 %v70, %v69
    %v74 = vsel %vm37, %v66, 0
    %76 = vmatpush.bf16.msra.mxu0 0
    %77 = vmatpush.bf16.msra.mxu0 0
    %78 = vmatpush.bf16.msra.mxu0 0
    %79 = vmatpush.bf16.msra.mxu0 0
    %80 = vmatpush.bf16.msra.mxu0 0
    %81 = vmatpush.bf16.msra.mxu0 0
    %82 = vmatpush.bf16.msra.mxu0 0
    %83 = vmatpush.bf16.msra.mxu0 %v71
    %84 = vmatmul.bf16.gmra.mxu0 %v74
    %v85 = vpop.f32.mrf.mxu0
    %v86 = vadd.f32 0.0, %v85
    %v87 = vpop.f32.mrf.mxu0
    %88 = vdwg.mxu0
    %vm89 = vcmp.eq.s32.totalorder %v35, %v59
    %v90 = vsel %vm89, %v86, 0.0
    %v91 = vsel %vm37, %v90, 0.0
    %92 = vadd.xlane.f32.xlu0 %v91
    %v93 = vpop.xlane.xlu0 %92
    %v94 = vlaneseq
    %v95 = vshrl.u32 %v94, 7
    %s96 = smul.u32 0, 8
    %v97 = vstv %s96
    %v98 = vadd.s32 %v97, %v95
    %vm99 = vcmp.lt.s32.totalorder %v98, 8
    %v100 = vsel %vm99, %v93, 0.0
    %v101 = vrot.slane %v100, 4
    %v102 = vadd.f32 %v100, %v101
    %v103 = vrot.slane %v102, 2
    %v104 = vadd.f32 %v102, %v103
    %v105 = vrot.slane %v104, 1
    %v106 = vadd.f32 %v104, %v105
    %vm107 = vcmask 0
    %108 = vst.msk [vmem:[#allocation5] sm:$0x1] %vm107, %v106
    // Predicated region
    $region18: #{tpu_custom_call.1} parent=1 // pred_check
      _
    $region19: #{tpu_custom_call.1} parent=1 // pred_check_branch
      %110 = sbr.rel (0) target = $region21
    $region20: #{tpu_custom_call.1} parent=1 // pred_region
      %112 = vsyncadd [#allocation4], 0
      %s114 = sshll.u32 [#allocation5], 4
      %s115 = int_to_ptr.vmem [resolvable:$true] %s114
      %s116 = sshll.u32 %s3, 4
      %s117 = int_to_ptr.hbm [resolvable:$true] %s116
      %119 = dma.vmem_to_hbm [thread:$0]  %s115, 16, %s117, [#allocation4]
    $region21: #{tpu_custom_call.1} parent=1 // pred_fallthru
      _
    // Predicated region
    $region22: #{tpu_custom_call.1} parent=1 // pred_check
      _
    $region23: #{tpu_custom_call.1} parent=1 // pred_check_branch
      %121 = sbr.rel (0) target = $region25
    $region24: #{tpu_custom_call.1} parent=1 // pred_region
      %123 = dma.done [#allocation4], 16
    $region25: #{tpu_custom_call.1} parent=1 // pred_fallthru
      _
    %124 = vsyncpa [#allocation3], 1
    %125 = vsyncpa [#allocation4], 1

</llo_original>
